<compile_context>
chip_gen: v6e
topology: v6e:2x2x1
jax: 0.10.0
libtpu: 0.0.40
codegen_flags: <defaults>
</compile_context>

<pallas_src>
import jax
import jax.numpy as jnp
from jax.experimental import pallas as pl
from jax.experimental.pallas import tpu as pltpu

EPS = 1e-5
KPAD = 16    # contraction padding for x / W1 (sublane-tile multiple)
NPAD = 128   # lane-aligned feature padding for the hidden dims


def quantize_jax(x, min_val, max_val):
    """Plain-JAX mirror of the PyTorch-side quantize(): np.linspace + np.digitize."""
    bins = jnp.linspace(min_val, max_val, 10)
    ind = jnp.searchsorted(bins, x, side="right")  # == np.digitize(x, bins)
    return bins, ind


def _mlp_bn_kernel(x_ref, w1_ref, w2_ref, vec_ref, o_ref, xpad_ref):
    """Whole forward pass in one VMEM-resident kernel (shapes are tiny).

    x_ref:   (B, 13)      input (unpadded; padded in-kernel)
    w1_ref:  (16, 128)    L1 weight, (K=13 -> 16, N=10 -> 128)
    w2_ref:  (128, 128)   L2 weight, (K=10, N=5) zero-padded
    vec_ref: (8, 128)     rows: g1, be1, g2, be2, w3 (5 lanes), b3 (lane 0)
    o_ref:   (B, 1)       sigmoid output
    xpad_ref:(B, 16)      VMEM scratch for lane-padded x
    """
    B = x_ref.shape[0]
    F = x_ref.shape[1]
    inv_b = 1.0 / B

    # --- pad x K-dim 13 -> 16 in VMEM (no wrapper-side pad / HBM roundtrip) ---
    xpad_ref[...] = jnp.zeros_like(xpad_ref)
    xpad_ref[:, :F] = x_ref[...]
    x = xpad_ref[...]                                 # (B, 16)

    g1 = vec_ref[0:1, :]
    be1 = vec_ref[1:2, :]
    g2 = vec_ref[2:3, :]
    be2 = vec_ref[3:4, :]
    w3row = vec_ref[4:5, :]
    b3 = vec_ref[5:6, 0:1]                            # (1, 1)

    # --- Linear(13,10) (bias cancelled by BN) + BatchNorm1d(10) + ReLU ---
    h = jnp.dot(x, w1_ref[...], preferred_element_type=jnp.float32)   # (B, 128)
    s1 = jnp.sum(h, axis=0, keepdims=True)
    s2 = jnp.sum(h * h, axis=0, keepdims=True)
    m = s1 * inv_b
    v = jnp.maximum(s2 * inv_b - m * m, 0.0)          # biased batch variance, clamped
    a = g1 * jax.lax.rsqrt(v + EPS)                   # folded BN affine
    c = be1 - m * a
    h = jnp.maximum(h * a + c, 0.0)

    # --- Linear(10,5) (bias cancelled by BN) + BatchNorm1d(5) + ReLU ---
    h = jnp.dot(h, w2_ref[...], preferred_element_type=jnp.float32)   # (B, 128)
    s1 = jnp.sum(h, axis=0, keepdims=True)
    s2 = jnp.sum(h * h, axis=0, keepdims=True)
    m = s1 * inv_b
    v = jnp.maximum(s2 * inv_b - m * m, 0.0)
    a = g2 * jax.lax.rsqrt(v + EPS)
    c = be2 - m * a
    h = jnp.maximum(h * a + c, 0.0)

    # --- Linear(5,1) + Sigmoid on VPU/XLU (no MXU pass; w3 lanes >=5 are zero) ---
    logits = jnp.sum(h * w3row, axis=-1, keepdims=True) + b3          # (B, 1)
    o_ref[...] = jax.nn.sigmoid(logits)


def prepare_params(params):
    """One-time packing/padding of parameters (hoisted out of the call path)."""
    (w1, b1, g1, be1, w2, b2, g2, be2, w3, b3) = params
    del b1, b2  # exactly cancelled by training-mode BatchNorm mean subtraction

    w1p = jnp.zeros((KPAD, NPAD), jnp.float32).at[: w1.shape[0], : w1.shape[1]].set(w1)
    w2p = jnp.zeros((NPAD, NPAD), jnp.float32).at[: w2.shape[0], : w2.shape[1]].set(w2)

    # Zero-padding of the gamma/beta/w3 rows keeps all padded lanes exactly 0
    # through both BN stages and out of the final lane reduction.
    vec = jnp.zeros((8, NPAD), jnp.float32)
    vec = vec.at[0, : g1.shape[0]].set(g1)
    vec = vec.at[1, : be1.shape[0]].set(be1)
    vec = vec.at[2, : g2.shape[0]].set(g2)
    vec = vec.at[3, : be2.shape[0]].set(be2)
    vec = vec.at[4, : w3.shape[0]].set(w3[:, 0])      # L3 weight as a lane row
    vec = vec.at[5, 0].set(b3[0])                     # L3 bias (scalar)

    return (w1p, w2p, vec)


@jax.jit
def model1_forward(x, packed_params):
    """x: (B, 13) float32 -> (B, 1) float32."""
    w1p, w2p, vec = packed_params
    B, _ = x.shape

    vmem = pl.BlockSpec(memory_space=pltpu.MemorySpace.VMEM)
    return pl.pallas_call(
        _mlp_bn_kernel,
        out_shape=jax.ShapeDtypeStruct((B, 1), jnp.float32),
        in_specs=[vmem, vmem, vmem, vmem],
        out_specs=vmem,
        scratch_shapes=[pltpu.VMEM((B, KPAD), jnp.float32)],
        compiler_params=pltpu.CompilerParams(vmem_limit_bytes=48 * 1024 * 1024),
    )(x, w1p, w2p, vec)


def init_params(key):
    """Deterministic init mimicking PyTorch Linear defaults U(-1/sqrt(fan_in), +)."""
    ks = jax.random.split(key, 6)

    def lin(kw, kb, fan_in, fan_out):
        bound = 1.0 / jnp.sqrt(fan_in)
        w = jax.random.uniform(kw, (fan_in, fan_out), jnp.float32, -bound, bound)
        b = jax.random.uniform(kb, (fan_out,), jnp.float32, -bound, bound)
        return w, b

    w1, b1 = lin(ks[0], ks[1], 13, 10)
    w2, b2 = lin(ks[2], ks[3], 10, 5)
    w3, b3 = lin(ks[4], ks[5], 5, 1)
    # BatchNorm affine params (PyTorch default: gamma=1, beta=0)
    g1, be1 = jnp.ones((10,), jnp.float32), jnp.zeros((10,), jnp.float32)
    g2, be2 = jnp.ones((5,), jnp.float32), jnp.zeros((5,), jnp.float32)
    return (w1, b1, g1, be1, w2, b2, g2, be2, w3, b3)


if __name__ == "__main__":
    key = jax.random.PRNGKey(0)
    k_x, k_p = jax.random.split(key)

    B, F = 8, 13
    x = jax.random.normal(k_x, (B, F), jnp.float32)
    params = init_params(k_p)

    # Side-effect bookkeeping from the PyTorch module (bins/ind per input feature
    # and per layer weight). Does not influence the returned output.
    bins_list, ind_list = [], []
    for f in range(F):
        col = x[:, f]
        bins, ind = quantize_jax(col, jnp.min(col), jnp.max(col))
        bins_list.append(bins)
        ind_list.append(ind)
    for w in (params[0], params[4], params[8]):
        wflat = w.reshape(-1)
        quantize_jax(wflat, jnp.min(wflat), jnp.max(wflat))

    # One-time parameter packing (hoisted out of the per-call jitted path).
    packed = prepare_params(params)
    packed = jax.tree_util.tree_map(jax.block_until_ready, packed)

    out = model1_forward(x, packed)
    out = jax.block_until_ready(out)
    assert out.shape == (B, 1), out.shape
    assert bool(jnp.all(jnp.isfinite(out)))
    assert bool(jnp.all((out > 0.0) & (out < 1.0)))
    print("KERNEL_OK")
</pallas_src>

<mosaic_0001>
module attributes {stable_mosaic.version = 11 : i64} {
  func.func @_mlp_bn_kernel(%arg0: memref<8x13xf32, #tpu.memory_space<vmem>>, %arg1: memref<16x128xf32, #tpu.memory_space<vmem>>, %arg2: memref<128x128xf32, #tpu.memory_space<vmem>>, %arg3: memref<8x128xf32, #tpu.memory_space<vmem>>, %arg4: memref<8x1xf32, #tpu.memory_space<vmem>>, %arg5: memref<8x16xf32, #tpu.memory_space<vmem>>) attributes {dimension_semantics = [], scalar_prefetch = 0 : i64, scratch_operands = 1 : i64, tpu.core_type = #tpu.core_type<tc>} {
    %cst = arith.constant 0.000000e+00 : f32
    %0 = vector.broadcast %cst : f32 to vector<8x16xf32>
    %c0 = arith.constant 0 : index
    %c0_0 = arith.constant 0 : index
    %1 = vector.load %arg5[%c0, %c0_0] : memref<8x16xf32, #tpu.memory_space<vmem>>, vector<8x16xf32>
    tpu.vector_store %arg5[%c0, %c0_0], %0 {strides = array<i32>} : memref<8x16xf32, #tpu.memory_space<vmem>>, vector<8x16xf32>,
    %c0_1 = arith.constant 0 : index
    %c0_2 = arith.constant 0 : index
    %2 = vector.load %arg0[%c0_1, %c0_2] : memref<8x13xf32, #tpu.memory_space<vmem>>, vector<8x13xf32>
    %c0_3 = arith.constant 0 : index
    %c0_4 = arith.constant 0 : index
    %3 = vector.load %arg5[%c0_3, %c0_4] : memref<8x16xf32, #tpu.memory_space<vmem>>, vector<8x13xf32>
    tpu.vector_store %arg5[%c0_3, %c0_4], %2 {strides = array<i32>} : memref<8x16xf32, #tpu.memory_space<vmem>>, vector<8x13xf32>,
    %c0_5 = arith.constant 0 : index
    %c0_6 = arith.constant 0 : index
    %4 = vector.load %arg5[%c0_5, %c0_6] : memref<8x16xf32, #tpu.memory_space<vmem>>, vector<8x16xf32>
    %c0_7 = arith.constant 0 : index
    %c0_8 = arith.constant 0 : index
    %5 = vector.load %arg3[%c0_7, %c0_8] : memref<8x128xf32, #tpu.memory_space<vmem>>, vector<1x128xf32>
    %c1 = arith.constant 1 : index
    %c0_9 = arith.constant 0 : index
    %6 = vector.load %arg3[%c1, %c0_9] : memref<8x128xf32, #tpu.memory_space<vmem>>, vector<1x128xf32>
    %c2 = arith.constant 2 : index
    %c0_10 = arith.constant 0 : index
    %7 = vector.load %arg3[%c2, %c0_10] : memref<8x128xf32, #tpu.memory_space<vmem>>, vector<1x128xf32>
    %c3 = arith.constant 3 : index
    %c0_11 = arith.constant 0 : index
    %8 = vector.load %arg3[%c3, %c0_11] : memref<8x128xf32, #tpu.memory_space<vmem>>, vector<1x128xf32>
    %c4 = arith.constant 4 : index
    %c0_12 = arith.constant 0 : index
    %9 = vector.load %arg3[%c4, %c0_12] : memref<8x128xf32, #tpu.memory_space<vmem>>, vector<1x128xf32>
    %c5 = arith.constant 5 : index
    %c0_13 = arith.constant 0 : index
    %10 = vector.load %arg3[%c5, %c0_13] : memref<8x128xf32, #tpu.memory_space<vmem>>, vector<1x1xf32>
    %c0_14 = arith.constant 0 : index
    %c0_15 = arith.constant 0 : index
    %11 = vector.load %arg1[%c0_14, %c0_15] : memref<16x128xf32, #tpu.memory_space<vmem>>, vector<16x128xf32>
    %cst_16 = arith.constant dense<0.000000e+00> : vector<8x128xf32>
    %12 = tpu.matmul %4, %11, %cst_16 {dimension_numbers = #tpu.dot_dimension_numbers<[1], [0], [0], [1], [0, 0, 1, 1], [], []>} : vector<8x16xf32>, vector<16x128xf32>, vector<8x128xf32> -> vector<8x128xf32>
    %cst_17 = arith.constant dense<0.000000e+00> : vector<128xf32>
    %13 = vector.multi_reduction <add>, %12, %cst_17 [0] : vector<8x128xf32> to vector<128xf32>
    %14 = vector.shape_cast %13 : vector<128xf32> to vector<1x128xf32>
    %15 = arith.mulf %12, %12 : vector<8x128xf32>
    %cst_18 = arith.constant dense<0.000000e+00> : vector<128xf32>
    %16 = vector.multi_reduction <add>, %15, %cst_18 [0] : vector<8x128xf32> to vector<128xf32>
    %17 = vector.shape_cast %16 : vector<128xf32> to vector<1x128xf32>
    %cst_19 = arith.constant 1.250000e-01 : f32
    %18 = vector.broadcast %cst_19 : f32 to vector<1x128xf32>
    %19 = arith.mulf %14, %18 : vector<1x128xf32>
    %cst_20 = arith.constant 1.250000e-01 : f32
    %20 = vector.broadcast %cst_20 : f32 to vector<1x128xf32>
    %21 = arith.mulf %17, %20 : vector<1x128xf32>
    %22 = arith.mulf %19, %19 : vector<1x128xf32>
    %23 = arith.subf %21, %22 : vector<1x128xf32>
    %cst_21 = arith.constant 0.000000e+00 : f32
    %24 = vector.broadcast %cst_21 : f32 to vector<1x128xf32>
    %25 = arith.maximumf %23, %24 : vector<1x128xf32>
    %cst_22 = arith.constant 9.99999974E-6 : f32
    %26 = vector.broadcast %cst_22 : f32 to vector<1x128xf32>
    %27 = arith.addf %25, %26 : vector<1x128xf32>
    %28 = math.rsqrt %27 : vector<1x128xf32>
    %29 = arith.mulf %5, %28 : vector<1x128xf32>
    %30 = arith.mulf %19, %29 : vector<1x128xf32>
    %31 = arith.subf %6, %30 : vector<1x128xf32>
    %32 = vector.broadcast %29 : vector<1x128xf32> to vector<8x128xf32>
    %33 = arith.mulf %12, %32 : vector<8x128xf32>
    %34 = vector.broadcast %31 : vector<1x128xf32> to vector<8x128xf32>
    %35 = arith.addf %33, %34 : vector<8x128xf32>
    %cst_23 = arith.constant 0.000000e+00 : f32
    %36 = vector.broadcast %cst_23 : f32 to vector<8x128xf32>
    %37 = arith.maximumf %35, %36 : vector<8x128xf32>
    %c0_24 = arith.constant 0 : index
    %c0_25 = arith.constant 0 : index
    %38 = vector.load %arg2[%c0_24, %c0_25] : memref<128x128xf32, #tpu.memory_space<vmem>>, vector<128x128xf32>
    %cst_26 = arith.constant dense<0.000000e+00> : vector<8x128xf32>
    %39 = tpu.matmul %37, %38, %cst_26 {dimension_numbers = #tpu.dot_dimension_numbers<[1], [0], [0], [1], [0, 0, 1, 1], [], []>} : vector<8x128xf32>, vector<128x128xf32>, vector<8x128xf32> -> vector<8x128xf32>
    %cst_27 = arith.constant dense<0.000000e+00> : vector<128xf32>
    %40 = vector.multi_reduction <add>, %39, %cst_27 [0] : vector<8x128xf32> to vector<128xf32>
    %41 = vector.shape_cast %40 : vector<128xf32> to vector<1x128xf32>
    %42 = arith.mulf %39, %39 : vector<8x128xf32>
    %cst_28 = arith.constant dense<0.000000e+00> : vector<128xf32>
    %43 = vector.multi_reduction <add>, %42, %cst_28 [0] : vector<8x128xf32> to vector<128xf32>
    %44 = vector.shape_cast %43 : vector<128xf32> to vector<1x128xf32>
    %cst_29 = arith.constant 1.250000e-01 : f32
    %45 = vector.broadcast %cst_29 : f32 to vector<1x128xf32>
    %46 = arith.mulf %41, %45 : vector<1x128xf32>
    %cst_30 = arith.constant 1.250000e-01 : f32
    %47 = vector.broadcast %cst_30 : f32 to vector<1x128xf32>
    %48 = arith.mulf %44, %47 : vector<1x128xf32>
    %49 = arith.mulf %46, %46 : vector<1x128xf32>
    %50 = arith.subf %48, %49 : vector<1x128xf32>
    %cst_31 = arith.constant 0.000000e+00 : f32
    %51 = vector.broadcast %cst_31 : f32 to vector<1x128xf32>
    %52 = arith.maximumf %50, %51 : vector<1x128xf32>
    %cst_32 = arith.constant 9.99999974E-6 : f32
    %53 = vector.broadcast %cst_32 : f32 to vector<1x128xf32>
    %54 = arith.addf %52, %53 : vector<1x128xf32>
    %55 = math.rsqrt %54 : vector<1x128xf32>
    %56 = arith.mulf %7, %55 : vector<1x128xf32>
    %57 = arith.mulf %46, %56 : vector<1x128xf32>
    %58 = arith.subf %8, %57 : vector<1x128xf32>
    %59 = vector.broadcast %56 : vector<1x128xf32> to vector<8x128xf32>
    %60 = arith.mulf %39, %59 : vector<8x128xf32>
    %61 = vector.broadcast %58 : vector<1x128xf32> to vector<8x128xf32>
    %62 = arith.addf %60, %61 : vector<8x128xf32>
    %cst_33 = arith.constant 0.000000e+00 : f32
    %63 = vector.broadcast %cst_33 : f32 to vector<8x128xf32>
    %64 = arith.maximumf %62, %63 : vector<8x128xf32>
    %65 = vector.broadcast %9 : vector<1x128xf32> to vector<8x128xf32>
    %66 = arith.mulf %64, %65 : vector<8x128xf32>
    %cst_34 = arith.constant dense<0.000000e+00> : vector<8xf32>
    %67 = vector.multi_reduction <add>, %66, %cst_34 [1] : vector<8x128xf32> to vector<8xf32>
    %68 = vector.shape_cast %67 : vector<8xf32> to vector<8x1xf32>
    %69 = vector.broadcast %10 : vector<1x1xf32> to vector<8x1xf32>
    %70 = arith.addf %68, %69 : vector<8x1xf32>
    %71 = arith.negf %70 : vector<8x1xf32>
    %72 = math.exp %71 : vector<8x1xf32>
    %cst_35 = arith.constant 1.000000e+00 : f32
    %73 = vector.broadcast %cst_35 : f32 to vector<8x1xf32>
    %74 = arith.addf %73, %72 : vector<8x1xf32>
    %75 = arith.divf %73, %74 : vector<8x1xf32>
    %c0_36 = arith.constant 0 : index
    %c0_37 = arith.constant 0 : index
    %76 = vector.load %arg4[%c0_36, %c0_37] : memref<8x1xf32, #tpu.memory_space<vmem>>, vector<8x1xf32>
    tpu.vector_store %arg4[%c0_36, %c0_37], %75 {strides = array<i32>} : memref<8x1xf32, #tpu.memory_space<vmem>>, vector<8x1xf32>,
    return
  }
}

</mosaic_0001>

<llo_original>
// kernel: model1_forward.1
$region0: #{model1_forward.1}
  #allocation0 [shape = 'u32[]', space=smem, size = 0x4, offset = 0x4, fixed_abs, tag = 'smem constant byte address 0x4 - core index']
  #allocation1 [shape = 'u32[144,128]{1,0:T(1,128)}', space=vmem, size = 0x12000, scoped, tag = 'internal scratch']
  #allocation2 [shape = 'f32[8,16]{1,0:T(8,128)}', space=vmem, size = 0x1000, scoped, tag = 'scratch operand']
  %s0 = inlined_call_operand.hbm [shape: f32[8,13], index: 0, kind: input, shape index: {}]
  %s1 = inlined_call_operand.hbm [shape: f32[16,128], index: 1, kind: input, shape index: {}]
  %s2 = inlined_call_operand.hbm [shape: f32[128,128], index: 2, kind: input, shape index: {}]
  %s3 = inlined_call_operand.hbm [shape: f32[8,128], index: 3, kind: input, shape index: {}]
  %s4 = inlined_call_operand.vmem [shape: f32[8,1], index: 4, kind: output, shape index: {}]
  %s5 = sld [smem:[#allocation0]]
  $region42: #{model1_forward.1} parent=0
    _
  %s7 = ssub.s32 1, %s5
  %s8 = scalar_select 0, %s7, %s5
  $region1: #{model1_forward.1} parent=0
    #allocation3 [shape = 'u8[4096]{0}', space=vmem, size = 0x1000, scoped, tag = 'input window, operand 0, single buffered']
    #allocation4 [shape = 's32[1]{0}', space=sflag, size = 0x4, scoped, tag = 'scoped memory for model1_forward.1']
    #allocation5 [shape = 'u8[8192]{0}', space=vmem, size = 0x2000, scoped, tag = 'input window, operand 1, single buffered']
    #allocation6 [shape = 's32[1]{0}', space=sflag, size = 0x4, scoped, tag = 'scoped memory for model1_forward.1']
    #allocation7 [shape = 'u8[65536]{0}', space=vmem, size = 0x10000, scoped, tag = 'input window, operand 2, single buffered']
    #allocation8 [shape = 'u8[4096]{0}', space=vmem, size = 0x1000, scoped, tag = 'input window, operand 3, single buffered']
    #allocation9 [shape = 's32[1]{0}', space=sflag, size = 0x4, scoped, tag = 'scoped memory for model1_forward.1']
    %9 = vsyncpa [#allocation4], 0
    %10 = vsyncpa [#allocation6], 0
    %11 = vsyncpa [#allocation9], 0
    // Predicated region
    $region2: #{model1_forward.1} parent=1 // pred_check
      _
    $region3: #{model1_forward.1} parent=1 // pred_check_branch
      %13 = sbr.rel (0) target = $region5
    $region4: #{model1_forward.1} parent=1 // pred_region
      %s15 = ssub.s32 128, 128
      %16 = vsyncadd [#allocation4], %s15
      %s18 = sshll.u32 [#allocation3], 4
      %s19 = int_to_ptr.vmem [resolvable:$true] %s18
      %21 = dma.hbm_to_vmem [thread:$0]  %s0, 128, %s19, [#allocation4]
    $region5: #{model1_forward.1} parent=1 // pred_fallthru
      _
    // Predicated region
    $region6: #{model1_forward.1} parent=1 // pred_check
      _
    $region7: #{model1_forward.1} parent=1 // pred_check_branch
      %23 = sbr.rel (0) target = $region9
    $region8: #{model1_forward.1} parent=1 // pred_region
      %s25 = ssub.s32 256, 256
      %26 = vsyncadd [#allocation6], %s25
      %s27 = sshll.u32 [#allocation5], 4
      %s28 = int_to_ptr.vmem [resolvable:$true] %s27
      %33 = dma.hbm_to_vmem [thread:$0]  %s1, 256, %s28, [#allocation6], 128, 128, 8
    $region9: #{model1_forward.1} parent=1 // pred_fallthru
      _
    // Predicated region
    $region10: #{model1_forward.1} parent=1 // pred_check
      _
    $region11: #{model1_forward.1} parent=1 // pred_check_branch
      %35 = sbr.rel (0) target = $region13
    $region12: #{model1_forward.1} parent=1 // pred_region
      %s37 = ssub.s32 2048, 2048
      %38 = vsyncadd [#allocation6], %s37
      %s39 = sshll.u32 [#allocation7], 4
      %s40 = int_to_ptr.vmem [resolvable:$true] %s39
      %45 = dma.hbm_to_vmem [thread:$0]  %s2, 2048, %s40, [#allocation6], 128, 128, 8
    $region13: #{model1_forward.1} parent=1 // pred_fallthru
      _
    // Predicated region
    $region14: #{model1_forward.1} parent=1 // pred_check
      _
    $region15: #{model1_forward.1} parent=1 // pred_check_branch
      %47 = sbr.rel (0) target = $region17
    $region16: #{model1_forward.1} parent=1 // pred_region
      %s49 = ssub.s32 128, 128
      %50 = vsyncadd [#allocation9], %s49
      %s52 = sshll.u32 [#allocation8], 4
      %s53 = int_to_ptr.vmem [resolvable:$true] %s52
      %55 = dma.hbm_to_vmem [thread:$0]  %s3, 128, %s53, [#allocation9]
    $region17: #{model1_forward.1} parent=1 // pred_fallthru
      _
    // Predicated region
    $region18: #{model1_forward.1} parent=1 // pred_check
      _
    $region19: #{model1_forward.1} parent=1 // pred_check_branch
      %57 = sbr.rel (0) target = $region21
    $region20: #{model1_forward.1} parent=1 // pred_region
      %58 = dma.done [#allocation4], 128
    $region21: #{model1_forward.1} parent=1 // pred_fallthru
      _
    // Predicated region
    $region22: #{model1_forward.1} parent=1 // pred_check
      _
    $region23: #{model1_forward.1} parent=1 // pred_check_branch
      %60 = sbr.rel (0) target = $region25
    $region24: #{model1_forward.1} parent=1 // pred_region
      %61 = dma.done [#allocation6], 256
    $region25: #{model1_forward.1} parent=1 // pred_fallthru
      _
    // Predicated region
    $region26: #{model1_forward.1} parent=1 // pred_check
      _
    $region27: #{model1_forward.1} parent=1 // pred_check_branch
      %63 = sbr.rel (0) target = $region29
    $region28: #{model1_forward.1} parent=1 // pred_region
      %64 = dma.done [#allocation6], 2048
    $region29: #{model1_forward.1} parent=1 // pred_fallthru
      _
    // Predicated region
    $region30: #{model1_forward.1} parent=1 // pred_check
      _
    $region31: #{model1_forward.1} parent=1 // pred_check_branch
      %66 = sbr.rel (0) target = $region33
    $region32: #{model1_forward.1} parent=1 // pred_region
      %67 = dma.done [#allocation9], 128
    $region33: #{model1_forward.1} parent=1 // pred_fallthru
      _
    %vm68 = vcmask 130048
    %69 = vst.msk [vmem:[#allocation2] sm:$0xff] %vm68, 0.0
    %v70 = vld [vmem:[#allocation3] sm:$0xff]
    %vm71 = vcmask 105472
    %72 = vst.msk [vmem:[#allocation2] sm:$0xff] %vm71, %v70
    %v73 = vld [vmem:[#allocation2] sm:$0xff]
    %v74 = vld [vmem:[#allocation8] sm:$0x1]
    %v75 = vld [vmem:[#allocation8 + $0x1] sm:$0x1]
    %v76 = vld [vmem:[#allocation8 + $0x2] sm:$0x1]
    %v77 = vld [vmem:[#allocation8 + $0x3] sm:$0x1]
    %v78 = vld [vmem:[#allocation8 + $0x4] sm:$0x1]
    %v79 = vld [vmem:[#allocation8 + $0x5] sm:$0x1]
    %v80 = vld [vmem:[#allocation5] sm:$0xff]
    %v81 = vld [vmem:[#allocation5 + $0x8] sm:$0xff]
    %v83 = vsel %vm68, %v73, 0
    %85 = vmatprep.subr.mxu0 0.0
    %86 = vmatpush1.msra.mxu0 0.0
    %87 = vmatprep.subr.mxu0 0.0
    %88 = vmatpush1.msra.mxu0 0.0
    %89 = vmatprep.subr.mxu0 0.0
    %90 = vmatpush1.msra.mxu0 0.0
    %91 = vmatprep.subr.mxu0 0.0
    %92 = vmatpush1.msra.mxu0 0.0
    %93 = vmatprep.subr.mxu0 0.0
    %94 = vmatpush1.msra.mxu0 0.0
    %95 = vmatprep.subr.mxu0 0.0
    %96 = vmatpush1.msra.mxu0 0.0
    %97 = vmatprep.subr.mxu0 0.0
    %98 = vmatpush1.msra.mxu0 0.0
    %99 = vmatprep.subr.mxu0 0.0
    %100 = vmatpush1.msra.mxu0 0.0
    %101 = vmatprep.subr.mxu0 0.0
    %102 = vmatpush1.msra.mxu0 0.0
    %103 = vmatprep.subr.mxu0 0.0
    %104 = vmatpush1.msra.mxu0 0.0
    %105 = vmatprep.subr.mxu0 0.0
    %106 = vmatpush1.msra.mxu0 0.0
    %107 = vmatprep.subr.mxu0 0.0
    %108 = vmatpush1.msra.mxu0 0.0
    %109 = vmatprep.subr.mxu0 0.0
    %110 = vmatpush1.msra.mxu0 0.0
    %111 = vmatprep.subr.mxu0 0.0
    %112 = vmatpush1.msra.mxu0 0.0
    %113 = vmatprep.subr.mxu0 0.0
    %114 = vmatpush1.msra.mxu0 %v81
    %115 = vmatprep.subr.mxu0 0.0
    %116 = vmatpush1.msra.mxu0 %v80
    %117 = vmatprep.subr.mxu0 0.0
    %118 = vmatpush2.msra.mxu0 0.0
    %119 = vmatprep.subr.mxu0 0.0
    %120 = vmatpush2.msra.mxu0 0.0
    %121 = vmatprep.subr.mxu0 0.0
    %122 = vmatpush2.msra.mxu0 0.0
    %123 = vmatprep.subr.mxu0 0.0
    %124 = vmatpush2.msra.mxu0 0.0
    %125 = vmatprep.subr.mxu0 0.0
    %126 = vmatpush2.msra.mxu0 0.0
    %127 = vmatprep.subr.mxu0 0.0
    %128 = vmatpush2.msra.mxu0 0.0
    %129 = vmatprep.subr.mxu0 0.0
    %130 = vmatpush2.msra.mxu0 0.0
    %131 = vmatprep.subr.mxu0 0.0
    %132 = vmatpush2.msra.mxu0 0.0
    %133 = vmatprep.subr.mxu0 0.0
    %134 = vmatpush2.msra.mxu0 0.0
    %135 = vmatprep.subr.mxu0 0.0
    %136 = vmatpush2.msra.mxu0 0.0
    %137 = vmatprep.subr.mxu0 0.0
    %138 = vmatpush2.msra.mxu0 0.0
    %139 = vmatprep.subr.mxu0 0.0
    %140 = vmatpush2.msra.mxu0 0.0
    %141 = vmatprep.subr.mxu0 0.0
    %142 = vmatpush2.msra.mxu0 0.0
    %143 = vmatprep.subr.mxu0 0.0
    %144 = vmatpush2.msra.mxu0 0.0
    %145 = vmatprep.subr.mxu0 0.0
    %146 = vmatpush2.msra.mxu0 0.0
    %147 = vmatprep.subr.mxu0 0.0
    %148 = vmatpush2.msra.mxu0 0.0
    %149 = vmatprep.mubr.f32.mxu0 0.0
    %150 = vmatmul.mubr.f32.gmra.mxu0 %v83
    %v151 = vpop.f32.mrf.mxu0
    %v152 = vadd.f32 0.0, %v151
    %v153 = vpop.f32.mrf.mxu0
    %154 = vdwg.mxu0
    %v155 = vrot.slane %v152, 4
    %v156 = vadd.f32 %v152, %v155
    %v157 = vrot.slane %v156, 2
    %v158 = vadd.f32 %v156, %v157
    %v159 = vrot.slane %v158, 1
    %v160 = vadd.f32 %v158, %v159
    %v161 = vmul.f32 %v152, %v152
    %v162 = vrot.slane %v161, 4
    %v163 = vadd.f32 %v161, %v162
    %v164 = vrot.slane %v163, 2
    %v165 = vadd.f32 %v163, %v164
    %v166 = vrot.slane %v165, 1
    %v167 = vadd.f32 %v165, %v166
    %v168 = vmul.f32 %v160, 0.125
    %v169 = vmul.f32 %v167, 0.125
    %v170 = vmul.f32 %v168, %v168
    %v171 = vsub.f32 %v169, %v170
    %v172 = vmax.f32 %v171, 0.0
    %v173 = vadd.f32 %v172, 1e-05
    %v174 = vrsqrt.pop %v173
    %v175 = vmul.f32 %v74, %v174
    %v176 = vmul.f32 %v168, %v175
    %v177 = vsub.f32 %v75, %v176
    %v178 = vlaneseq
    %v179 = vshrl.u32 %v178, 7
    %v180 = vsub.s32 0, %v179
    %v181 = vrot.slane %v175, %v180
    %v182 = vmul.f32 %v152, %v181
    %v183 = vlaneseq
    %v184 = vshrl.u32 %v183, 7
    %v185 = vsub.s32 0, %v184
    %v186 = vrot.slane %v177, %v185
    %v187 = vadd.f32 %v182, %v186
    %v188 = vmax.f32 %v187, 0.0
    %v189 = vld [vmem:[#allocation7] sm:$0xff]
    %v190 = vld [vmem:[#allocation7 + $0x8] sm:$0xff]
    %v191 = vld [vmem:[#allocation7 + $0x10] sm:$0xff]
    %v192 = vld [vmem:[#allocation7 + $0x18] sm:$0xff]
    %v193 = vld [vmem:[#allocation7 + $0x20] sm:$0xff]
    %v194 = vld [vmem:[#allocation7 + $0x28] sm:$0xff]
    %v195 = vld [vmem:[#allocation7 + $0x30] sm:$0xff]
    %v196 = vld [vmem:[#allocation7 + $0x38] sm:$0xff]
    %v197 = vld [vmem:[#allocation7 + $0x40] sm:$0xff]
    %v198 = vld [vmem:[#allocation7 + $0x48] sm:$0xff]
    %v199 = vld [vmem:[#allocation7 + $0x50] sm:$0xff]
    %v200 = vld [vmem:[#allocation7 + $0x58] sm:$0xff]
    %v201 = vld [vmem:[#allocation7 + $0x60] sm:$0xff]
    %v202 = vld [vmem:[#allocation7 + $0x68] sm:$0xff]
    %v203 = vld [vmem:[#allocation7 + $0x70] sm:$0xff]
    %v204 = vld [vmem:[#allocation7 + $0x78] sm:$0xff]
    %205 = vmatprep.subr.mxu0 0.0
    %206 = vmatpush1.msra.mxu0 %v204
    %207 = vmatprep.subr.mxu0 0.0
    %208 = vmatpush1.msra.mxu0 %v203
    %209 = vmatprep.subr.mxu0 0.0
    %210 = vmatpush1.msra.mxu0 %v202
    %211 = vmatprep.subr.mxu0 0.0
    %212 = vmatpush1.msra.mxu0 %v201
    %213 = vmatprep.subr.mxu0 0.0
    %214 = vmatpush1.msra.mxu0 %v200
    %215 = vmatprep.subr.mxu0 0.0
    %216 = vmatpush1.msra.mxu0 %v199
    %217 = vmatprep.subr.mxu0 0.0
    %218 = vmatpush1.msra.mxu0 %v198
    %219 = vmatprep.subr.mxu0 0.0
    %220 = vmatpush1.msra.mxu0 %v197
    %221 = vmatprep.subr.mxu0 0.0
    %222 = vmatpush1.msra.mxu0 %v196
    %223 = vmatprep.subr.mxu0 0.0
    %224 = vmatpush1.msra.mxu0 %v195
    %225 = vmatprep.subr.mxu0 0.0
    %226 = vmatpush1.msra.mxu0 %v194
    %227 = vmatprep.subr.mxu0 0.0
    %228 = vmatpush1.msra.mxu0 %v193
    %229 = vmatprep.subr.mxu0 0.0
    %230 = vmatpush1.msra.mxu0 %v192
    %231 = vmatprep.subr.mxu0 0.0
    %232 = vmatpush1.msra.mxu0 %v191
    %233 = vmatprep.subr.mxu0 0.0
    %234 = vmatpush1.msra.mxu0 %v190
    %235 = vmatprep.subr.mxu0 0.0
    %236 = vmatpush1.msra.mxu0 %v189
    %237 = vmatprep.subr.mxu0 0.0
    %238 = vmatpush2.msra.mxu0 0.0
    %239 = vmatprep.subr.mxu0 0.0
    %240 = vmatpush2.msra.mxu0 0.0
    %241 = vmatprep.subr.mxu0 0.0
    %242 = vmatpush2.msra.mxu0 0.0
    %243 = vmatprep.subr.mxu0 0.0
    %244 = vmatpush2.msra.mxu0 0.0
    %245 = vmatprep.subr.mxu0 0.0
    %246 = vmatpush2.msra.mxu0 0.0
    %247 = vmatprep.subr.mxu0 0.0
    %248 = vmatpush2.msra.mxu0 0.0
    %249 = vmatprep.subr.mxu0 0.0
    %250 = vmatpush2.msra.mxu0 0.0
    %251 = vmatprep.subr.mxu0 0.0
    %252 = vmatpush2.msra.mxu0 0.0
    %253 = vmatprep.subr.mxu0 0.0
    %254 = vmatpush2.msra.mxu0 0.0
    %255 = vmatprep.subr.mxu0 0.0
    %256 = vmatpush2.msra.mxu0 0.0
    %257 = vmatprep.subr.mxu0 0.0
    %258 = vmatpush2.msra.mxu0 0.0
    %259 = vmatprep.subr.mxu0 0.0
    %260 = vmatpush2.msra.mxu0 0.0
    %261 = vmatprep.subr.mxu0 0.0
    %262 = vmatpush2.msra.mxu0 0.0
    %263 = vmatprep.subr.mxu0 0.0
    %264 = vmatpush2.msra.mxu0 0.0
    %265 = vmatprep.subr.mxu0 0.0
    %266 = vmatpush2.msra.mxu0 0.0
    %267 = vmatprep.subr.mxu0 0.0
    %268 = vmatpush2.msra.mxu0 0.0
    %269 = vmatprep.mubr.f32.mxu0 0.0
    %270 = vmatmul.mubr.f32.gmra.mxu0 %v188
    %v271 = vpop.f32.mrf.mxu0
    %v272 = vadd.f32 0.0, %v271
    %v273 = vpop.f32.mrf.mxu0
    %274 = vdwg.mxu0
    %v275 = vrot.slane %v272, 4
    %v276 = vadd.f32 %v272, %v275
    %v277 = vrot.slane %v276, 2
    %v278 = vadd.f32 %v276, %v277
    %v279 = vrot.slane %v278, 1
    %v280 = vadd.f32 %v278, %v279
    %v281 = vmul.f32 %v272, %v272
    %v282 = vrot.slane %v281, 4
    %v283 = vadd.f32 %v281, %v282
    %v284 = vrot.slane %v283, 2
    %v285 = vadd.f32 %v283, %v284
    %v286 = vrot.slane %v285, 1
    %v287 = vadd.f32 %v285, %v286
    %v288 = vmul.f32 %v280, 0.125
    %v289 = vmul.f32 %v287, 0.125
    %v290 = vmul.f32 %v288, %v288
    %v291 = vsub.f32 %v289, %v290
    %v292 = vmax.f32 %v291, 0.0
    %v293 = vadd.f32 %v292, 1e-05
    %v294 = vrsqrt.pop %v293
    %v295 = vmul.f32 %v76, %v294
    %v296 = vmul.f32 %v288, %v295
    %v297 = vsub.f32 %v77, %v296
    %v298 = vlaneseq
    %v299 = vshrl.u32 %v298, 7
    %v300 = vsub.s32 0, %v299
    %v301 = vrot.slane %v295, %v300
    %v302 = vmul.f32 %v272, %v301
    %v303 = vlaneseq
    %v304 = vshrl.u32 %v303, 7
    %v305 = vsub.s32 0, %v304
    %v306 = vrot.slane %v297, %v305
    %v307 = vadd.f32 %v302, %v306
    %v308 = vmax.f32 %v307, 0.0
    %v309 = vlaneseq
    %v310 = vshrl.u32 %v309, 7
    %v311 = vsub.s32 0, %v310
    %v312 = vrot.slane %v78, %v311
    %v313 = vmul.f32 %v308, %v312
    %314 = vadd.xlane.f32.xlu0 %v313
    %v315 = vpop.xlane.xlu0 %314
    %v316 = vlaneseq
    %v317 = vshrl.u32 %v316, 7
    %v318 = vsub.s32 0, %v317
    %v319 = vrot.slane %v79, %v318
    %v320 = vadd.f32 %v315, %v319
    %v321 = vxor.u32 %v320, 2147483648
    %v322 = vmul.f32 %v321, 1.442695
    %v323 = vpow.pop %v322
    %v324 = vadd.f32 %v323, 1.0
    %v325 = vrcp.pop %v324
    %v326 = vmul.f32 1.0, %v325
    %vm327 = vcmask 7168
    %328 = vst.msk [vmem:[%s4] sm:$0xff] %vm327, %v326
    // Predicated region
    $region34: #{model1_forward.1} parent=1 // pred_check
      _
    $region35: #{model1_forward.1} parent=1 // pred_check_branch
      %330 = sbr.rel (0) target = $region37
    $region36: #{model1_forward.1} parent=1 // pred_region
      _
    $region37: #{model1_forward.1} parent=1 // pred_fallthru
      _
    // Predicated region
    $region38: #{model1_forward.1} parent=1 // pred_check
      _
    $region39: #{model1_forward.1} parent=1 // pred_check_branch
      %332 = sbr.rel (0) target = $region41
    $region40: #{model1_forward.1} parent=1 // pred_region
      _
    $region41: #{model1_forward.1} parent=1 // pred_fallthru
      _
    %333 = vsyncpa [#allocation4], 1
    %334 = vsyncpa [#allocation6], 1
    %335 = vsyncpa [#allocation9], 1

</llo_original>
